<compile_context>
chip_gen: v6e
topology: v6e:2x2x1
jax: 0.10.0
libtpu: 0.0.40
codegen_flags: <defaults>
</compile_context>

<pallas_src>
import functools

import numpy as np

import jax
import jax.numpy as jnp
from jax import lax
from jax.experimental import pallas as pl
from jax.experimental.pallas import tpu as pltpu


EPS = 1e-5
NEG_SLOPE = 0.2


def _block_kernel(patches_ref, w_ref, b_ref, o_ref, sum_ref, ssq_ref, *,
                  p_valid, p_pad, tp, single_pass):
    # patches_ref: (1, TP, CK) bf16   w_ref: (CK, CO) bf16   b_ref: (1, CO) f32
    # o_ref:       (1, TP, CO)        sum_ref / ssq_ref: (1, CO) f32 scratch
    pt = pl.program_id(2)

    # Conv-as-matmul on the MXU: bf16 operands, f32 accumulation, full CK in one
    # shot (no accumulator read-modify-write).  Bias is added to mirror the
    # PyTorch module exactly (InstanceNorm removes the per-channel shift again).
    y = jnp.dot(patches_ref[0], w_ref[...],
                preferred_element_type=jnp.float32) + b_ref[...]     # (TP, CO)

    def _masked(v):
        # Zero rows that are spatial padding so they do not pollute the stats.
        if p_valid == p_pad:                      # static: no padded rows
            return v
        rows = lax.broadcasted_iota(jnp.int32, v.shape, 0) + pt * tp
        return jnp.where(rows < p_valid, v, 0.0)

    def _accumulate_stats():
        ym = _masked(y)
        s = jnp.sum(ym, axis=0, keepdims=True)                       # (1, CO)
        ss = jnp.sum(ym * ym, axis=0, keepdims=True)                 # (1, CO)

        @pl.when(pt == 0)
        def _():                      # first tile: write directly (no zero+add)
            sum_ref[...] = s
            ssq_ref[...] = ss

        @pl.when(pt > 0)
        def _():
            sum_ref[...] = sum_ref[...] + s
            ssq_ref[...] = ssq_ref[...] + ss

    def _normalize_and_store():
        inv_n = jnp.float32(1.0 / p_valid)
        mean = sum_ref[...] * inv_n                                   # (1, CO)
        var = jnp.maximum(ssq_ref[...] * inv_n - mean * mean, 0.0)
        y_hat = (y - mean) * lax.rsqrt(var + jnp.float32(EPS))
        out = jnp.where(y_hat >= 0, y_hat, jnp.float32(NEG_SLOPE) * y_hat)
        o_ref[0] = out.astype(o_ref.dtype)

    if single_pass:
        # Whole spatial map in one tile: stats + normalize in a single visit.
        _accumulate_stats()
        _normalize_and_store()
    else:
        ph = pl.program_id(1)

        @pl.when(ph == 0)
        def _():
            _accumulate_stats()

        @pl.when(ph == 1)
        def _():
            _normalize_and_store()


def _im2col_reflect(x, k, stride):
    # x: (N, C, H, W) -> patches (N, P, C*k*k) in bf16, reflect pad = 1.
    n, c, h, w = x.shape
    xb = x.astype(jnp.bfloat16)
    xp = jnp.pad(xb, ((0, 0), (0, 0), (1, 1), (1, 1)), mode="reflect")
    h_out = (h + 2 - k) // stride + 1
    w_out = (w + 2 - k) // stride + 1
    cols = []
    for ki in range(k):
        for kj in range(k):
            cols.append(xp[:, :,
                           ki: ki + stride * (h_out - 1) + 1: stride,
                           kj: kj + stride * (w_out - 1) + 1: stride])
    patches = jnp.stack(cols, axis=2).reshape(n, c, k, k, h_out, w_out)
    patches = jnp.transpose(patches, (0, 4, 5, 1, 2, 3))   # (N,Ho,Wo,C,k,k)
    return patches.reshape(n, h_out * w_out, c * k * k), h_out, w_out


def _round_up(v, m):
    return (v + m - 1) // m * m


def _vmem_budget_bytes():
    # ~75% of per-core VMEM: ~48 MiB on v7x (64 MiB), ~96 MiB on v5e/v6e (128 MiB).
    try:
        cap = int(pltpu.get_tpu_info().vmem_capacity_bytes)
    except Exception:
        cap = 64 << 20                          # safe fallback for all generations
    return (cap * 3) // 4


def _pick_spatial_tile(p, ck, co, out_bytes, budget):
    # Largest spatial tile (rows of the im2col matrix, multiple of 8) whose
    # per-grid-step footprint fits the VMEM budget:
    #   2x patches block (tp, ck) bf16 + 2x out block (tp, co)
    #   + resident weight (ck, co) bf16 (counted x2) + bias + stats scratch.
    fixed = 2 * ck * co * 2 + 3 * co * 4 + (2 << 20)
    per_row = 2 * ck * 2 + 2 * co * out_bytes
    tp = max((budget - fixed) // max(per_row, 1), 8)
    tp = min(tp, 2048, _round_up(p, 8))
    return max((tp // 8) * 8, 8)


@functools.partial(jax.jit, static_argnames=("stride", "spatial_tile", "out_dtype"))
def block_forward(x, weight, bias, *, stride, spatial_tile=None, out_dtype=None):
    # x: (N, C_in, H, W)  weight: (C_out, C_in, 4, 4)  bias: (C_out,)
    n, c_in, _, _ = x.shape
    c_out, _, k, _ = weight.shape
    out_dtype = x.dtype if out_dtype is None else out_dtype
    out_bytes = np.dtype(out_dtype).itemsize

    patches, h_out, w_out = _im2col_reflect(x, k, stride)    # (N, P, CK) bf16
    p = h_out * w_out
    ck = c_in * k * k

    # Lane-dense output channels only when the padding overhead is small;
    # tiny C_out keeps its natural width (full-dim block is legal and avoids
    # 16x wasted MXU work / writeback for e.g. C_out=8).
    co_p = _round_up(c_out, 128) if c_out >= 128 else c_out

    budget = _vmem_budget_bytes()
    if spatial_tile is None:
        tp = _pick_spatial_tile(p, ck, co_p, out_bytes, budget)
    else:
        tp = max((int(spatial_tile) // 8) * 8, 8)
    p_pad = _round_up(p, tp)
    n_p = p_pad // tp
    single_pass = (n_p == 1)
    n_phase = 1 if single_pass else 2

    if p_pad != p:    # pad spatial rows only if the tile does not divide P
        patches = jnp.pad(patches, ((0, 0), (0, p_pad - p), (0, 0)))

    w2d = weight.reshape(c_out, ck).T.astype(jnp.bfloat16)   # (CK, C_out)
    b2d = bias.astype(jnp.float32).reshape(1, c_out)
    if co_p != c_out:
        # Padded channels see zero weights AND zero bias -> y = 0 -> var = 0 ->
        # rsqrt(eps) finite -> output 0; they are sliced off below.
        w2d = jnp.pad(w2d, ((0, 0), (0, co_p - c_out)))
        b2d = jnp.pad(b2d, ((0, 0), (0, co_p - c_out)))

    footprint = (2 * tp * ck * 2 + 2 * ck * co_p * 2 + 3 * co_p * 4
                 + 2 * tp * co_p * out_bytes + (2 << 20))
    vmem_limit = int(max(budget, (footprint * 5) // 4))

    kernel = functools.partial(_block_kernel, p_valid=p, p_pad=p_pad, tp=tp,
                               single_pass=single_pass)

    out = pl.pallas_call(
        kernel,
        out_shape=jax.ShapeDtypeStruct((n, p_pad, co_p), out_dtype),
        grid_spec=pltpu.PrefetchScalarGridSpec(
            num_scalar_prefetch=0,
            grid=(n, n_phase, n_p),
            in_specs=[
                pl.BlockSpec((1, tp, ck), lambda i, ph, pt: (i, pt, 0)),
                pl.BlockSpec((ck, co_p), lambda i, ph, pt: (0, 0)),   # resident
                pl.BlockSpec((1, co_p), lambda i, ph, pt: (0, 0)),    # resident
            ],
            # Phase 0 parks the (unwritten) output block at spatial block 0, so
            # nothing is written back until phase 1 produced real data; every
            # HBM output block is written exactly once.
            out_specs=pl.BlockSpec((1, tp, co_p),
                                   lambda i, ph, pt: (i, ph * pt, 0)),
            scratch_shapes=[pltpu.VMEM((1, co_p), jnp.float32),   # per-chan sum
                            pltpu.VMEM((1, co_p), jnp.float32)],  # per-chan sumsq
        ),
        compiler_params=pltpu.CompilerParams(
            # Samples are independent -> megacore shards the N axis; the phase
            # and spatial-tile axes carry the stats dependency -> arbitrary.
            dimension_semantics=("parallel", "arbitrary", "arbitrary"),
            vmem_limit_bytes=vmem_limit),
    )(patches, w2d, b2d)

    # (N, P_pad, C_out_pad) -> (N, C_out, H_out, W_out)
    out = out[:, :p, :c_out].reshape(n, h_out, w_out, c_out)
    return jnp.transpose(out, (0, 3, 1, 2)).astype(out_dtype)


def _reference(x, weight, bias, stride):
    # Plain-JAX reference.  Inputs rounded through bf16 to mirror the kernel's
    # bf16 operand storage (accumulation stays f32 in both paths).
    xq = x.astype(jnp.bfloat16).astype(jnp.float32)
    wq = weight.astype(jnp.bfloat16).astype(jnp.float32)
    xp = jnp.pad(xq, ((0, 0), (0, 0), (1, 1), (1, 1)), mode="reflect")
    y = lax.conv_general_dilated(
        xp, wq, window_strides=(stride, stride), padding="VALID",
        dimension_numbers=("NCHW", "OIHW", "NCHW"))
    y = y + bias[None, :, None, None]
    mean = jnp.mean(y, axis=(2, 3), keepdims=True)
    var = jnp.mean((y - mean) ** 2, axis=(2, 3), keepdims=True)
    yh = (y - mean) * lax.rsqrt(var + EPS)
    return jnp.where(yh >= 0, yh, NEG_SLOPE * yh)


if __name__ == "__main__":
    key = jax.random.PRNGKey(0)
    k_x, k_w, k_b, k_x2 = jax.random.split(key, 4)

    N, C_IN, C_OUT, K = 2, 4, 8, 4
    fan_in = C_IN * K * K
    bound = 1.0 / (fan_in ** 0.5)
    weight = jax.random.uniform(k_w, (C_OUT, C_IN, K, K), jnp.float32,
                                minval=-bound, maxval=bound)
    bias = jax.random.uniform(k_b, (C_OUT,), jnp.float32,
                              minval=-bound, maxval=bound)

    # Test 1: stride 2 on 16x16 -> auto tiling (single spatial tile path).
    x1 = jax.random.normal(k_x, (N, C_IN, 16, 16), dtype=jnp.float32)
    out1 = block_forward(x1, weight, bias, stride=2)
    jax.block_until_ready(out1)
    ref1 = _reference(x1, weight, bias, 2)
    assert out1.shape == ref1.shape == (N, C_OUT, 8, 8)
    err1 = float(jnp.max(jnp.abs(out1 - ref1)))
    assert jnp.allclose(out1, ref1, atol=5e-3, rtol=5e-3), err1

    # Test 2: stride 1 on 14x14 with a forced small spatial tile -> exercises the
    # two-pass (P-tiled) instance-norm path including padded-row masking
    # (P = 13*13 = 169, tile 64 -> 3 tiles, 23 padded rows).
    x2 = jax.random.normal(k_x2, (N, C_IN, 14, 14), dtype=jnp.float32)
    out2 = block_forward(x2, weight, bias, stride=1, spatial_tile=64)
    jax.block_until_ready(out2)
    ref2 = _reference(x2, weight, bias, 1)
    assert out2.shape == ref2.shape == (N, C_OUT, 13, 13)
    err2 = float(jnp.max(jnp.abs(out2 - ref2)))
    assert jnp.allclose(out2, ref2, atol=5e-3, rtol=5e-3), err2

    print("KERNEL_OK")
</pallas_src>

<mosaic_0001>
module attributes {stable_mosaic.version = 11 : i64} {
  func.func @_block_kernel(%arg0: i32, %arg1: i32, %arg2: i32, %arg3: memref<1x64x64xbf16, #tpu.memory_space<vmem>>, %arg4: memref<64x8xbf16, #tpu.memory_space<vmem>>, %arg5: memref<1x8xf32, #tpu.memory_space<vmem>>, %arg6: memref<1x64x8xf32, #tpu.memory_space<vmem>>, %arg7: memref<1x8xf32, #tpu.memory_space<vmem>>, %arg8: memref<1x8xf32, #tpu.memory_space<vmem>>) attributes {dimension_semantics = [#tpu.dimension_semantics<parallel>, #tpu.dimension_semantics<arbitrary>, #tpu.dimension_semantics<arbitrary>], iteration_bounds = array<i64: 2, 1, 1>, scalar_prefetch = 0 : i64, scratch_operands = 2 : i64, tpu.core_type = #tpu.core_type<tc>, window_params = [{transform_indices = @transform_0, window_bounds = array<i64: 1, 64, 64>}, {pipeline_mode = #tpu.pipeline_mode<synchronous>, transform_indices = @transform_1, window_bounds = array<i64: 64, 8>}, {pipeline_mode = #tpu.pipeline_mode<synchronous>, transform_indices = @transform_2, window_bounds = array<i64: 1, 8>}, {transform_indices = @transform_3, window_bounds = array<i64: 1, 64, 8>}]} {
    %c0 = arith.constant 0 : index
    %c0_0 = arith.constant 0 : index
    %c0_1 = arith.constant 0 : index
    %0 = vector.load %arg3[%c0, %c0_0, %c0_1] : memref<1x64x64xbf16, #tpu.memory_space<vmem>>, vector<1x64x64xbf16>
    %1 = vector.shape_cast %0 : vector<1x64x64xbf16> to vector<64x64xbf16>
    %c0_2 = arith.constant 0 : index
    %c0_3 = arith.constant 0 : index
    %2 = vector.load %arg4[%c0_2, %c0_3] : memref<64x8xbf16, #tpu.memory_space<vmem>>, vector<64x8xbf16>
    %cst = arith.constant dense<0.000000e+00> : vector<64x8xf32>
    %3 = tpu.matmul %1, %2, %cst {dimension_numbers = #tpu.dot_dimension_numbers<[1], [0], [0], [1], [0, 0, 1, 1], [], []>} : vector<64x64xbf16>, vector<64x8xbf16>, vector<64x8xf32> -> vector<64x8xf32>
    %c0_4 = arith.constant 0 : index
    %c0_5 = arith.constant 0 : index
    %4 = vector.load %arg5[%c0_4, %c0_5] : memref<1x8xf32, #tpu.memory_space<vmem>>, vector<1x8xf32>
    %5 = vector.broadcast %4 : vector<1x8xf32> to vector<64x8xf32>
    %6 = arith.addf %3, %5 : vector<64x8xf32>
    %cst_6 = arith.constant dense<0.000000e+00> : vector<8xf32>
    %7 = vector.multi_reduction <add>, %6, %cst_6 [0] : vector<64x8xf32> to vector<8xf32>
    %8 = vector.shape_cast %7 : vector<8xf32> to vector<1x8xf32>
    %9 = arith.mulf %6, %6 : vector<64x8xf32>
    %cst_7 = arith.constant dense<0.000000e+00> : vector<8xf32>
    %10 = vector.multi_reduction <add>, %9, %cst_7 [0] : vector<64x8xf32> to vector<8xf32>
    %11 = vector.shape_cast %10 : vector<8xf32> to vector<1x8xf32>
    %c0_i32 = arith.constant 0 : i32
    %12 = arith.cmpi eq, %arg2, %c0_i32 : i32
    %13 = arith.extui %12 : i1 to i32
    %c0_i32_8 = arith.constant 0 : i32
    %14 = arith.cmpi ne, %13, %c0_i32_8 : i32
    scf.if %14 {
      %c0_24 = arith.constant 0 : index
      %c0_25 = arith.constant 0 : index
      %43 = vector.load %arg7[%c0_24, %c0_25] : memref<1x8xf32, #tpu.memory_space<vmem>>, vector<1x8xf32>
      tpu.vector_store %arg7[%c0_24, %c0_25], %8 {strides = array<i32>} : memref<1x8xf32, #tpu.memory_space<vmem>>, vector<1x8xf32>,
      %c0_26 = arith.constant 0 : index
      %c0_27 = arith.constant 0 : index
      %44 = vector.load %arg8[%c0_26, %c0_27] : memref<1x8xf32, #tpu.memory_space<vmem>>, vector<1x8xf32>
      tpu.vector_store %arg8[%c0_26, %c0_27], %11 {strides = array<i32>} : memref<1x8xf32, #tpu.memory_space<vmem>>, vector<1x8xf32>,
    } else {
    }
    %c0_i32_9 = arith.constant 0 : i32
    %15 = arith.cmpi sgt, %arg2, %c0_i32_9 : i32
    %16 = arith.extui %15 : i1 to i32
    %c0_i32_10 = arith.constant 0 : i32
    %17 = arith.cmpi ne, %16, %c0_i32_10 : i32
    scf.if %17 {
      %c0_24 = arith.constant 0 : index
      %c0_25 = arith.constant 0 : index
      %43 = vector.load %arg7[%c0_24, %c0_25] : memref<1x8xf32, #tpu.memory_space<vmem>>, vector<1x8xf32>
      %44 = arith.addf %43, %8 : vector<1x8xf32>
      %c0_26 = arith.constant 0 : index
      %c0_27 = arith.constant 0 : index
      %45 = vector.load %arg7[%c0_26, %c0_27] : memref<1x8xf32, #tpu.memory_space<vmem>>, vector<1x8xf32>
      tpu.vector_store %arg7[%c0_26, %c0_27], %44 {strides = array<i32>} : memref<1x8xf32, #tpu.memory_space<vmem>>, vector<1x8xf32>,
      %c0_28 = arith.constant 0 : index
      %c0_29 = arith.constant 0 : index
      %46 = vector.load %arg8[%c0_28, %c0_29] : memref<1x8xf32, #tpu.memory_space<vmem>>, vector<1x8xf32>
      %47 = arith.addf %46, %11 : vector<1x8xf32>
      %c0_30 = arith.constant 0 : index
      %c0_31 = arith.constant 0 : index
      %48 = vector.load %arg8[%c0_30, %c0_31] : memref<1x8xf32, #tpu.memory_space<vmem>>, vector<1x8xf32>
      tpu.vector_store %arg8[%c0_30, %c0_31], %47 {strides = array<i32>} : memref<1x8xf32, #tpu.memory_space<vmem>>, vector<1x8xf32>,
    } else {
    }
    %c0_11 = arith.constant 0 : index
    %c0_12 = arith.constant 0 : index
    %18 = vector.load %arg7[%c0_11, %c0_12] : memref<1x8xf32, #tpu.memory_space<vmem>>, vector<1x8xf32>
    %cst_13 = arith.constant 1.562500e-02 : f32
    %19 = vector.broadcast %cst_13 : f32 to vector<1x8xf32>
    %20 = arith.mulf %18, %19 : vector<1x8xf32>
    %c0_14 = arith.constant 0 : index
    %c0_15 = arith.constant 0 : index
    %21 = vector.load %arg8[%c0_14, %c0_15] : memref<1x8xf32, #tpu.memory_space<vmem>>, vector<1x8xf32>
    %cst_16 = arith.constant 1.562500e-02 : f32
    %22 = vector.broadcast %cst_16 : f32 to vector<1x8xf32>
    %23 = arith.mulf %21, %22 : vector<1x8xf32>
    %24 = arith.mulf %20, %20 : vector<1x8xf32>
    %25 = arith.subf %23, %24 : vector<1x8xf32>
    %cst_17 = arith.constant 0.000000e+00 : f32
    %26 = vector.broadcast %cst_17 : f32 to vector<1x8xf32>
    %27 = arith.maximumf %25, %26 : vector<1x8xf32>
    %28 = vector.broadcast %20 : vector<1x8xf32> to vector<64x8xf32>
    %29 = arith.subf %6, %28 : vector<64x8xf32>
    %cst_18 = arith.constant 9.99999974E-6 : f32
    %30 = vector.broadcast %cst_18 : f32 to vector<1x8xf32>
    %31 = arith.addf %27, %30 : vector<1x8xf32>
    %32 = math.rsqrt %31 : vector<1x8xf32>
    %33 = vector.broadcast %32 : vector<1x8xf32> to vector<64x8xf32>
    %34 = arith.mulf %29, %33 : vector<64x8xf32>
    %cst_19 = arith.constant 0.000000e+00 : f32
    %35 = vector.broadcast %cst_19 : f32 to vector<64x8xf32>
    %36 = arith.cmpf oge, %34, %35 : vector<64x8xf32>
    %cst_20 = arith.constant 2.000000e-01 : f32
    %37 = vector.broadcast %cst_20 : f32 to vector<64x8xf32>
    %38 = arith.mulf %37, %34 : vector<64x8xf32>
    %39 = arith.select %36, %34, %38 : vector<64x8xi1>, vector<64x8xf32>
    %c0_21 = arith.constant 0 : index
    %c0_22 = arith.constant 0 : index
    %c0_23 = arith.constant 0 : index
    %40 = vector.load %arg6[%c0_21, %c0_22, %c0_23] : memref<1x64x8xf32, #tpu.memory_space<vmem>>, vector<1x64x8xf32>
    %41 = vector.shape_cast %40 : vector<1x64x8xf32> to vector<64x8xf32>
    %42 = vector.shape_cast %39 : vector<64x8xf32> to vector<1x64x8xf32>
    tpu.vector_store %arg6[%c0_21, %c0_22, %c0_23], %42 {strides = array<i32>} : memref<1x64x8xf32, #tpu.memory_space<vmem>>, vector<1x64x8xf32>,
    return
  }
  func.func @transform_0(%arg0: i32, %arg1: i32, %arg2: i32) -> (i32, i32, i32) {
    %c0_i32 = arith.constant 0 : i32
    %c0_i32_0 = arith.constant 0 : i32
    return %arg0, %arg2, %c0_i32 : i32, i32, i32
  }
  func.func @transform_1(%arg0: i32, %arg1: i32, %arg2: i32) -> (i32, i32) {
    %c0_i32 = arith.constant 0 : i32
    %c0_i32_0 = arith.constant 0 : i32
    %c0_i32_1 = arith.constant 0 : i32
    return %c0_i32, %c0_i32_0 : i32, i32
  }
  func.func @transform_2(%arg0: i32, %arg1: i32, %arg2: i32) -> (i32, i32) {
    %c0_i32 = arith.constant 0 : i32
    %c0_i32_0 = arith.constant 0 : i32
    %c0_i32_1 = arith.constant 0 : i32
    return %c0_i32, %c0_i32_0 : i32, i32
  }
  func.func @transform_3(%arg0: i32, %arg1: i32, %arg2: i32) -> (i32, i32, i32) {
    %0 = arith.muli %arg1, %arg2 : i32
    %c0_i32 = arith.constant 0 : i32
    %c0_i32_0 = arith.constant 0 : i32
    return %arg0, %0, %c0_i32 : i32, i32, i32
  }
}

</mosaic_0001>

<llo_original>
// kernel: block_forward.1
$region0: #{block_forward.1}
  #allocation0 [shape = 'u32[]', space=smem, size = 0x4, offset = 0x4, fixed_abs, tag = 'smem constant byte address 0x4 - core index']
  #allocation1 [shape = 'u32[144,128]{1,0:T(1,128)}', space=vmem, size = 0x12000, scoped, tag = 'internal scratch']
  #allocation2 [shape = 'f32[1,8]{1,0:T(1,128)}', space=vmem, size = 0x200, scoped, tag = 'scratch operand']
  #allocation3 [shape = 'f32[1,8]{1,0:T(1,128)}', space=vmem, size = 0x200, scoped, tag = 'scratch operand']
  %s0 = inlined_call_operand.vmem [shape: bf16[2,64,64], index: 0, kind: input, shape index: {}]
  %s1 = inlined_call_operand.vmem [shape: bf16[64,8], index: 1, kind: input, shape index: {}]
  %s2 = inlined_call_operand.vmem [shape: f32[1,8], index: 2, kind: input, shape index: {}]
  %s3 = inlined_call_operand.vmem [shape: f32[2,64,8], index: 3, kind: output, shape index: {}]
  %s4 = sld [smem:[#allocation0]]
  $region53: #{block_forward.1} parent=0
    _
  %s6 = ssub.s32 1, %s4
  %s7 = scalar_select 0, %s6, %s4
  loop: start=0, step=1, limit=4
  $region2: #{block_forward.1} parent=0 // loop_pre_header
    _
  $region3: #{block_forward.1} parent=0 // loop_header
    %s9 = sphi 0, %s13
    %p10 = scmp.ge.s32.totalorder %s9, 4
    %s16 = sphi 0, %s35
    %s17 = sphi 0, %s31
    %s18 = sphi 0, %s27
    %s19 = sphi 0, %s16
    %s20 = sphi 0, %s17
    %s21 = sphi 0, %s18
    %s22 = sphi 0, %s19
    %s23 = sphi 0, %s20
    %s24 = sphi 0, %s21
    %s40 = sphi 0, %s42
    %s43 = sphi 0, %s40
    %s44 = sphi 0, %s43
    %s60 = sphi 0, %s44
    %s64 = sphi 0, %s64
    %s66 = sphi 0, %s64
    %s67 = sphi 0, %s66
    %s81 = sphi 0, %s67
    %s85 = sphi 0, %s85
    %s87 = sphi 0, %s85
    %s88 = sphi 0, %s87
    %s102 = sphi 0, %s88
    %s112 = sphi 0, %s114
    %s115 = sphi 0, %s112
    %s116 = sphi 0, %s115
    %s132 = sphi 0, %s116
  $region4: #{block_forward.1} parent=0 // loop_header_branch
    %12 = sbr.rel (%p10) target = $region8
  $region5: #{block_forward.1} parent=0 // loop_body
    %s14 = ssub.s32 %s9, 1
    %s15 = ssub.s32 %s9, 2
    %s25 = sadd.s32 1, %s18
    %p26 = scmp.ge.s32.totalorder %s25, 1
    %s27 = scalar_select %p26, 0, %s25
    %s28 = sadd.s32 1, %s17
    %s29 = scalar_select %p26, %s28, %s17
    %p30 = scmp.ge.s32.totalorder %s29, 1
    %s31 = scalar_select %p30, 0, %s29
    %s32 = sadd.s32 1, %s16
    %s33 = scalar_select %p30, %s32, %s16
    %p34 = scmp.ge.s32.totalorder %s33, 2
    %s35 = scalar_select %p34, 0, %s33
    %s36 = ssub.s32 %s16, %s35
    %s37 = ssub.s32 %s18, %s27
    %s38 = sor.u32 %s36, %s37
    %p39 = scmp.eq.s32.totalorder %s38, 0
    %s41 = sadd.s32 %s40, 1
    %s42 = scalar_select %p39, %s40, %s41
    %p45 = pneg %p39
    %p46 = scmp.eq.s32.totalorder %s9, 1
    %p47 = por %p45, %p46
    %p48 = scmp.ne.s32.totalorder %s40, %s43
    %p49 = scmp.eq.s32.totalorder %s9, 0
    %p50 = por %p48, %p49
    %p51 = scmp.ne.s32.totalorder %s40, %s43
    %p52 = scmp.eq.s32.totalorder %s14, 1
    %p53 = por %p51, %p52
    %p54 = scmp.ne.s32.totalorder %s43, %s44
    %p55 = scmp.eq.s32.totalorder %s14, 0
    %p56 = por %p54, %p55
    %p57 = scmp.ne.s32.totalorder %s43, %s44
    %p58 = scmp.eq.s32.totalorder %s15, 1
    %p59 = por %p57, %p58
    %p61 = scmp.ne.s32.totalorder %s44, %s60
    %p62 = scmp.eq.s32.totalorder %s15, 0
    %p63 = por %p61, %p62
    %s65 = sadd.s32 %s64, 1
    %p68 = scmp.eq.s32.totalorder %s9, 1
    %p69 = scmp.ne.s32.totalorder %s64, %s66
    %p70 = scmp.eq.s32.totalorder %s9, 0
    %p71 = por %p69, %p70
    %p72 = scmp.ne.s32.totalorder %s64, %s66
    %p73 = scmp.eq.s32.totalorder %s14, 1
    %p74 = por %p72, %p73
    %p75 = scmp.ne.s32.totalorder %s66, %s67
    %p76 = scmp.eq.s32.totalorder %s14, 0
    %p77 = por %p75, %p76
    %p78 = scmp.ne.s32.totalorder %s66, %s67
    %p79 = scmp.eq.s32.totalorder %s15, 1
    %p80 = por %p78, %p79
    %p82 = scmp.ne.s32.totalorder %s67, %s81
    %p83 = scmp.eq.s32.totalorder %s15, 0
    %p84 = por %p82, %p83
    %s86 = sadd.s32 %s85, 1
    %p89 = scmp.eq.s32.totalorder %s9, 1
    %p90 = scmp.ne.s32.totalorder %s85, %s87
    %p91 = scmp.eq.s32.totalorder %s9, 0
    %p92 = por %p90, %p91
    %p93 = scmp.ne.s32.totalorder %s85, %s87
    %p94 = scmp.eq.s32.totalorder %s14, 1
    %p95 = por %p93, %p94
    %p96 = scmp.ne.s32.totalorder %s87, %s88
    %p97 = scmp.eq.s32.totalorder %s14, 0
    %p98 = por %p96, %p97
    %p99 = scmp.ne.s32.totalorder %s87, %s88
    %p100 = scmp.eq.s32.totalorder %s15, 1
    %p101 = por %p99, %p100
    %p103 = scmp.ne.s32.totalorder %s88, %s102
    %p104 = scmp.eq.s32.totalorder %s15, 0
    %p105 = por %p103, %p104
    %s106 = smul.u32 %s17, %s18
    %s107 = smul.u32 %s31, %s27
    %s108 = ssub.s32 %s16, %s35
    %s109 = ssub.s32 %s106, %s107
    %s110 = sor.u32 %s108, %s109
    %p111 = scmp.eq.s32.totalorder %s110, 0
    %s113 = sadd.s32 %s112, 1
    %s114 = scalar_select %p111, %s112, %s113
    %p117 = pneg %p111
    %p118 = scmp.eq.s32.totalorder %s9, 1
    %p119 = por %p117, %p118
    %p120 = scmp.ne.s32.totalorder %s112, %s115
    %p121 = scmp.eq.s32.totalorder %s9, 0
    %p122 = por %p120, %p121
    %p123 = scmp.ne.s32.totalorder %s112, %s115
    %p124 = scmp.eq.s32.totalorder %s14, 1
    %p125 = por %p123, %p124
    %p126 = scmp.ne.s32.totalorder %s115, %s116
    %p127 = scmp.eq.s32.totalorder %s14, 0
    %p128 = por %p126, %p127
    %p129 = scmp.ne.s32.totalorder %s115, %s116
    %p130 = scmp.eq.s32.totalorder %s15, 1
    %p131 = por %p129, %p130
    %p133 = scmp.ne.s32.totalorder %s116, %s132
    %p134 = scmp.eq.s32.totalorder %s15, 0
    %p135 = por %p133, %p134
    %p136 = scmp.le.s32.totalorder 1, %s9
    %p137 = scmp.lt.s32.totalorder %s9, 3
    %p138 = pnand %p136, %p137
    %p139 = pneg %p138
    // Predicated region
    $region9: #{block_forward.1} parent=5 // pred_check
      _
    $region10: #{block_forward.1} parent=5 // pred_check_branch
      %141 = sbr.rel (%p138) target = $region12
    $region11: #{block_forward.1} parent=5 // pred_region
      %s142 = ssub.s32 %s9, 1
      // Predicated region
      $region13: #{block_forward.1} parent=11 // pred_check
        %p143 = pneg %p77
      $region14: #{block_forward.1} parent=11 // pred_check_branch
        %145 = sbr.rel (%p143) target = $region16
      $region15: #{block_forward.1} parent=11 // pred_region
        _
      $region16: #{block_forward.1} parent=11 // pred_fallthru
        _
      // Predicated region
      $region17: #{block_forward.1} parent=11 // pred_check
        %p146 = pneg %p98
      $region18: #{block_forward.1} parent=11 // pred_check_branch
        %148 = sbr.rel (%p146) target = $region20
      $region19: #{block_forward.1} parent=11 // pred_region
        _
      $region20: #{block_forward.1} parent=11 // pred_fallthru
        _
    $region12: #{block_forward.1} parent=5 // pred_fallthru
      _
    %p149 = scmp.lt.s32.totalorder %s9, 2
    // Predicated region
    $region21: #{block_forward.1} parent=5 // pred_check
      %p150 = pneg %p149
    $region22: #{block_forward.1} parent=5 // pred_check_branch
      %152 = sbr.rel (%p150) target = $region24
    $region23: #{block_forward.1} parent=5 // pred_region
      // Predicated region
      $region25: #{block_forward.1} parent=23 // pred_check
        %p153 = pneg %p50
      $region26: #{block_forward.1} parent=23 // pred_check_branch
        %155 = sbr.rel (%p153) target = $region28
      $region27: #{block_forward.1} parent=23 // pred_region
        %s156 = smul.u32 8, %s18
        %p157 = scmp.lt.s32.totalorder %s16, 1
        %s158 = scalar_select %p157, %s16, 1
        %p159 = scmp.lt.s32.totalorder %s156, 7
        %s160 = scalar_select %p159, %s156, 7
        %s161 = smul.addr %s158, 8
        %s162 = sadd.s32 %s160, %s161
        %s163 = smul.addr %s162, 4
        %s164 = scalar_lea.vmem %s0, %s163
        %s165 = smul.u32 8, %s18
      $region28: #{block_forward.1} parent=23 // pred_fallthru
        _
    $region24: #{block_forward.1} parent=5 // pred_fallthru
      _
    %p166 = scmp.le.s32.totalorder 1, %s9
    %p167 = scmp.lt.s32.totalorder %s9, 3
    %p168 = pnand %p166, %p167
    %p169 = pneg %p168
    // Predicated region
    $region29: #{block_forward.1} parent=5 // pred_check
      _
    $region30: #{block_forward.1} parent=5 // pred_check_branch
      %171 = sbr.rel (%p168) target = $region32
    $region31: #{block_forward.1} parent=5 // pred_region
      %s172 = ssub.s32 %s9, 1
      %s173 = smul.u32 8, %s21
      %p174 = scmp.lt.s32.totalorder %s19, 1
      %s175 = scalar_select %p174, %s19, 1
      %p176 = scmp.lt.s32.totalorder %s173, 7
      %s177 = scalar_select %p176, %s173, 7
      %s178 = smul.addr %s175, 8
      %s179 = sadd.s32 %s177, %s178
      %s180 = smul.addr %s179, 4
      %s181 = scalar_lea.vmem %s0, %s180
      %p182 = pneg %p56
      %p183 = pneg %p53
      %p184 = pneg %p77
      %p185 = pneg %p74
      %p186 = pneg %p98
      %p187 = pneg %p95
      %p188 = pneg %p128
      %p189 = pneg %p125
      %s190 = smul.u32 %s20, %s21
      %s191 = smul.u32 8, %s190
      %p192 = scmp.lt.s32.totalorder %s19, 1
      %s193 = scalar_select %p192, %s19, 1
      %p194 = scmp.lt.s32.totalorder %s191, 7
      %s195 = scalar_select %p194, %s191, 7
      %s196 = smul.addr %s193, 8
      %s197 = sadd.s32 %s195, %s196
      %s198 = smul.addr %s197, 8
      %s199 = scalar_lea.vmem %s3, %s198
      %s200 = smul.u32 8, %s21
      %p201 = scmp.lt.s32.totalorder %s19, 1
      %s202 = scalar_select %p201, %s19, 1
      %p203 = scmp.lt.s32.totalorder %s200, 7
      %s204 = scalar_select %p203, %s200, 7
      %s205 = smul.addr %s202, 8
      %s206 = sadd.s32 %s204, %s205
      %s207 = smul.addr %s206, 4
      %s208 = scalar_lea.vmem %s0, %s207
      %s209 = smul.u32 8, %s21
      %s210 = smul.u32 %s20, %s21
      %s211 = smul.u32 8, %s210
      %p212 = scmp.lt.s32.totalorder %s19, 1
      %s213 = scalar_select %p212, %s19, 1
      %p214 = scmp.lt.s32.totalorder %s211, 7
      %s215 = scalar_select %p214, %s211, 7
      %s216 = smul.addr %s213, 8
      %s217 = sadd.s32 %s215, %s216
      %s218 = smul.addr %s217, 8
      %s219 = scalar_lea.vmem %s3, %s218
      %s220 = smul.u32 %s20, %s21
      %s221 = smul.u32 8, %s220
      %v223 = vld [vmem:[%s208] sm:$0xf]
      %v224 = vld [vmem:[%s208 + $0x4] sm:$0xf]
      %v225 = vld [vmem:[%s208 + $0x8] sm:$0xf]
      %v226 = vld [vmem:[%s208 + $0xc] sm:$0xf]
      %v227 = vld [vmem:[%s208 + $0x10] sm:$0xf]
      %v228 = vld [vmem:[%s208 + $0x14] sm:$0xf]
      %v229 = vld [vmem:[%s208 + $0x18] sm:$0xf]
      %v230 = vld [vmem:[%s208 + $0x1c] sm:$0xf]
      %v231 = vld [vmem:[%s1] sm:$0xf]
      %v232 = vld [vmem:[%s1 + $0x4] sm:$0xf]
      %v233 = vld [vmem:[%s1 + $0x8] sm:$0xf]
      %v234 = vld [vmem:[%s1 + $0xc] sm:$0xf]
      %v235 = vld [vmem:[%s1 + $0x10] sm:$0xf]
      %v236 = vld [vmem:[%s1 + $0x14] sm:$0xf]
      %v237 = vld [vmem:[%s1 + $0x18] sm:$0xf]
      %v238 = vld [vmem:[%s1 + $0x1c] sm:$0xf]
      %v239 = vld [vmem:[%s2] sm:$0x1]
      %v241 = vlaneseq
      %v242 = vshrl.u32 %v241, 7
      %v243 = vsub.s32 0, %v242
      %v244 = vrot.slane %v239, %v243
      %v254 = vunpack.c.l.b16 %v223
      %v255 = vunpack.c.l.b16 %v224
      %v256 = vunpack.c.l.b16 %v225
      %v257 = vunpack.c.l.b16 %v226
      %v258 = vunpack.c.l.b16 %v227
      %v259 = vunpack.c.l.b16 %v228
      %v260 = vunpack.c.l.b16 %v229
      %v261 = vunpack.c.l.b16 %v230
      %v262 = vpack.c.b16 %v255, %v254
      %v263 = vpack.c.b16 %v257, %v256
      %v264 = vpack.c.b16 %v259, %v258
      %v265 = vpack.c.b16 %v261, %v260
      %v274 = vunpack.c.l.b16 %v231
      %v275 = vunpack.c.l.b16 %v232
      %v276 = vunpack.c.l.b16 %v233
      %v277 = vunpack.c.l.b16 %v234
      %v278 = vunpack.c.l.b16 %v235
      %v279 = vunpack.c.l.b16 %v236
      %v280 = vunpack.c.l.b16 %v237
      %v281 = vunpack.c.l.b16 %v238
      %v282 = vpack.c.b16 %v275, %v274
      %v283 = vpack.c.b16 %v277, %v276
      %v284 = vpack.c.b16 %v279, %v278
      %v285 = vpack.c.b16 %v281, %v280
      %vm290 = vcmask 523264
      %v292 = vsel %vm290, %v262, 0
      %v295 = vsel %vm290, %v263, 0
      %v298 = vsel %vm290, %v264, 0
      %v301 = vsel %vm290, %v265, 0
      %303 = vmatprep.subr.bf16.mxu0 0
      %304 = vmatpush1.bf16.msra.mxu0 0
      %305 = vmatprep.subr.bf16.mxu0 0
      %306 = vmatpush1.bf16.msra.mxu0 0
      %307 = vmatprep.subr.bf16.mxu0 0
      %308 = vmatpush1.bf16.msra.mxu0 0
      %309 = vmatprep.subr.bf16.mxu0 0
      %310 = vmatpush1.bf16.msra.mxu0 0
      %311 = vmatprep.subr.bf16.mxu0 0
      %312 = vmatpush1.bf16.msra.mxu0 %v285
      %313 = vmatprep.subr.bf16.mxu0 0
      %314 = vmatpush1.bf16.msra.mxu0 %v284
      %315 = vmatprep.subr.bf16.mxu0 0
      %316 = vmatpush1.bf16.msra.mxu0 %v283
      %317 = vmatprep.subr.bf16.mxu0 0
      %318 = vmatpush1.bf16.msra.mxu0 %v282
      %319 = vmatprep.subr.bf16.mxu0 0
      %320 = vmatpush2.bf16.msra.mxu0 0
      %321 = vmatprep.subr.bf16.mxu0 0
      %322 = vmatpush2.bf16.msra.mxu0 0
      %323 = vmatprep.subr.bf16.mxu0 0
      %324 = vmatpush2.bf16.msra.mxu0 0
      %325 = vmatprep.subr.bf16.mxu0 0
      %326 = vmatpush2.bf16.msra.mxu0 0
      %327 = vmatprep.subr.bf16.mxu0 0
      %328 = vmatpush2.bf16.msra.mxu0 0
      %329 = vmatprep.subr.bf16.mxu0 0
      %330 = vmatpush2.bf16.msra.mxu0 0
      %331 = vmatprep.subr.bf16.mxu0 0
      %332 = vmatpush2.bf16.msra.mxu0 0
      %333 = vmatprep.subr.bf16.mxu0 0
      %334 = vmatpush2.bf16.msra.mxu0 0
      %335 = vmatprep.mubr.bf16.mxu0 0
      %336 = vmatmul.mubr.bf16.gmra.mxu0 %v292
      %v337 = vpop.f32.mrf.mxu0
      %v338 = vadd.f32 %v244, %v337
      %v339 = vpop.f32.mrf.mxu0
      %v340 = vpop.f32.mrf.mxu0
      %v341 = vadd.f32 %v244, %v340
      %v342 = vpop.f32.mrf.mxu0
      %343 = vmatprep.mubr.bf16.mxu0 0
      %344 = vmatmul.mubr.bf16.gmra.mxu0 %v295
      %v345 = vpop.f32.mrf.mxu0
      %v346 = vadd.f32 %v244, %v345
      %v347 = vpop.f32.mrf.mxu0
      %v348 = vpop.f32.mrf.mxu0
      %v349 = vadd.f32 %v244, %v348
      %v350 = vpop.f32.mrf.mxu0
      %351 = vmatprep.mubr.bf16.mxu0 0
      %352 = vmatmul.mubr.bf16.gmra.mxu0 %v298
      %v353 = vpop.f32.mrf.mxu0
      %v354 = vadd.f32 %v244, %v353
      %v355 = vpop.f32.mrf.mxu0
      %v356 = vpop.f32.mrf.mxu0
      %v357 = vadd.f32 %v244, %v356
      %v358 = vpop.f32.mrf.mxu0
      %359 = vmatprep.mubr.bf16.mxu0 0
      %360 = vmatmul.mubr.bf16.gmra.mxu0 %v301
      %v361 = vpop.f32.mrf.mxu0
      %v362 = vadd.f32 %v244, %v361
      %v363 = vpop.f32.mrf.mxu0
      %v364 = vpop.f32.mrf.mxu0
      %v365 = vadd.f32 %v244, %v364
      %v366 = vpop.f32.mrf.mxu0
      %367 = vdwg.mxu0
      %vm368 = vcmask 64512
      %v369 = vsel %vm368, %v338, 0.0
      %v370 = vsel %vm368, %v341, 0.0
      %v371 = vadd.f32 %v369, %v370
      %v372 = vsel %vm368, %v346, 0.0
      %v373 = vadd.f32 %v371, %v372
      %v374 = vsel %vm368, %v349, 0.0
      %v375 = vadd.f32 %v373, %v374
      %v376 = vsel %vm368, %v354, 0.0
      %v377 = vadd.f32 %v375, %v376
      %v378 = vsel %vm368, %v357, 0.0
      %v379 = vadd.f32 %v377, %v378
      %v380 = vsel %vm368, %v362, 0.0
      %v381 = vadd.f32 %v379, %v380
      %v382 = vsel %vm368, %v365, 0.0
      %v383 = vadd.f32 %v381, %v382
      %v384 = vrot.slane %v383, 4
      %v385 = vadd.f32 %v383, %v384
      %v386 = vrot.slane %v385, 2
      %v387 = vadd.f32 %v385, %v386
      %v388 = vrot.slane %v387, 1
      %v389 = vadd.f32 %v387, %v388
      %v390 = vmul.f32 %v338, %v338
      %v391 = vmul.f32 %v341, %v341
      %v392 = vmul.f32 %v346, %v346
      %v393 = vmul.f32 %v349, %v349
      %v394 = vmul.f32 %v354, %v354
      %v395 = vmul.f32 %v357, %v357
      %v396 = vmul.f32 %v362, %v362
      %v397 = vmul.f32 %v365, %v365
      %v398 = vsel %vm368, %v390, 0.0
      %v399 = vsel %vm368, %v391, 0.0
      %v400 = vadd.f32 %v398, %v399
      %v401 = vsel %vm368, %v392, 0.0
      %v402 = vadd.f32 %v400, %v401
      %v403 = vsel %vm368, %v393, 0.0
      %v404 = vadd.f32 %v402, %v403
      %v405 = vsel %vm368, %v394, 0.0
      %v406 = vadd.f32 %v404, %v405
      %v407 = vsel %vm368, %v395, 0.0
      %v408 = vadd.f32 %v406, %v407
      %v409 = vsel %vm368, %v396, 0.0
      %v410 = vadd.f32 %v408, %v409
      %v411 = vsel %vm368, %v397, 0.0
      %v412 = vadd.f32 %v410, %v411
      %v413 = vrot.slane %v412, 4
      %v414 = vadd.f32 %v412, %v413
      %v415 = vrot.slane %v414, 2
      %v416 = vadd.f32 %v414, %v415
      %v417 = vrot.slane %v416, 1
      %v418 = vadd.f32 %v416, %v417
      %p419 = scmp.eq.s32.totalorder %s21, 0
      // Predicated region
      $region33: #{block_forward.1} parent=31 // pred_check
        %p420 = pneg %p419
      $region34: #{block_forward.1} parent=31 // pred_check_branch
        %422 = sbr.rel (%p420) target = $region36
      $region35: #{block_forward.1} parent=31 // pred_region
        %vm423 = vcmask 57344
        %424 = vst.msk [vmem:[#allocation2] sm:$0x1] %vm423, %v389
        %425 = vst.msk [vmem:[#allocation3] sm:$0x1] %vm423, %v418
      $region36: #{block_forward.1} parent=31 // pred_fallthru
        _
      %p426 = scmp.gt.s32.totalorder %s21, 0
      // Predicated region
      $region37: #{block_forward.1} parent=31 // pred_check
        %p427 = pneg %p426
      $region38: #{block_forward.1} parent=31 // pred_check_branch
        %429 = sbr.rel (%p427) target = $region40
      $region39: #{block_forward.1} parent=31 // pred_region
        %v430 = vld [vmem:[#allocation2] sm:$0x1]
        %v431 = vadd.f32 %v430, %v389
        %vm432 = vcmask 57344
        %433 = vst.msk [vmem:[#allocation2] sm:$0x1] %vm432, %v431
        %v434 = vld [vmem:[#allocation3] sm:$0x1]
        %v435 = vadd.f32 %v434, %v418
        %436 = vst.msk [vmem:[#allocation3] sm:$0x1] %vm432, %v435
      $region40: #{block_forward.1} parent=31 // pred_fallthru
        _
      %v437 = vld [vmem:[#allocation2] sm:$0x1]
      %v438 = vmul.f32 %v437, 0.015625
      %v439 = vld [vmem:[#allocation3] sm:$0x1]
      %v440 = vmul.f32 %v439, 0.015625
      %v441 = vmul.f32 %v438, %v438
      %v442 = vsub.f32 %v440, %v441
      %v443 = vmax.f32 %v442, 0.0
      %v445 = vlaneseq
      %v446 = vshrl.u32 %v445, 7
      %v447 = vsub.s32 0, %v446
      %v448 = vrot.slane %v438, %v447
      %v450 = vsub.f32 %v338, %v448
      %v451 = vsub.f32 %v341, %v448
      %v452 = vsub.f32 %v346, %v448
      %v453 = vsub.f32 %v349, %v448
      %v454 = vsub.f32 %v354, %v448
      %v455 = vsub.f32 %v357, %v448
      %v456 = vsub.f32 %v362, %v448
      %v457 = vsub.f32 %v365, %v448
      %v458 = vadd.f32 %v443, 1e-05
      %v459 = vrsqrt.pop %v458
      %v461 = vlaneseq
      %v462 = vshrl.u32 %v461, 7
      %v463 = vsub.s32 0, %v462
      %v464 = vrot.slane %v459, %v463
      %v466 = vmul.f32 %v450, %v464
      %v467 = vmul.f32 %v451, %v464
      %v468 = vmul.f32 %v452, %v464
      %v469 = vmul.f32 %v453, %v464
      %v470 = vmul.f32 %v454, %v464
      %v471 = vmul.f32 %v455, %v464
      %v472 = vmul.f32 %v456, %v464
      %v473 = vmul.f32 %v457, %v464
      %vm474 = vcmp.ge.f32.partialorder %v466, 0.0
      %vm475 = vcmp.ge.f32.partialorder %v467, 0.0
      %vm476 = vcmp.ge.f32.partialorder %v468, 0.0
      %vm477 = vcmp.ge.f32.partialorder %v469, 0.0
      %vm478 = vcmp.ge.f32.partialorder %v470, 0.0
      %vm479 = vcmp.ge.f32.partialorder %v471, 0.0
      %vm480 = vcmp.ge.f32.partialorder %v472, 0.0
      %vm481 = vcmp.ge.f32.partialorder %v473, 0.0
      %v482 = vmul.f32 %v466, 0.2
      %v483 = vmul.f32 %v467, 0.2
      %v484 = vmul.f32 %v468, 0.2
      %v485 = vmul.f32 %v469, 0.2
      %v486 = vmul.f32 %v470, 0.2
      %v487 = vmul.f32 %v471, 0.2
      %v488 = vmul.f32 %v472, 0.2
      %v489 = vmul.f32 %v473, 0.2
      %v490 = vsel %vm474, %v466, %v482
      %v491 = vsel %vm475, %v467, %v483
      %v492 = vsel %vm476, %v468, %v484
      %v493 = vsel %vm477, %v469, %v485
      %v494 = vsel %vm478, %v470, %v486
      %v495 = vsel %vm479, %v471, %v487
      %v496 = vsel %vm480, %v472, %v488
      %v497 = vsel %vm481, %v473, %v489
      %498 = vst.msk [vmem:[%s219] sm:$0xff] %vm368, %v490
      %499 = vst.msk [vmem:[%s219 + $0x8] sm:$0xff] %vm368, %v491
      %500 = vst.msk [vmem:[%s219 + $0x10] sm:$0xff] %vm368, %v492
      %501 = vst.msk [vmem:[%s219 + $0x18] sm:$0xff] %vm368, %v493
      %502 = vst.msk [vmem:[%s219 + $0x20] sm:$0xff] %vm368, %v494
      %503 = vst.msk [vmem:[%s219 + $0x28] sm:$0xff] %vm368, %v495
      %504 = vst.msk [vmem:[%s219 + $0x30] sm:$0xff] %vm368, %v496
      %505 = vst.msk [vmem:[%s219 + $0x38] sm:$0xff] %vm368, %v497
      %s506 = smul.u32 %s20, %s21
      %s507 = smul.u32 8, %s506
      %p508 = scmp.lt.s32.totalorder %s19, 1
      %s509 = scalar_select %p508, %s19, 1
      %p510 = scmp.lt.s32.totalorder %s507, 7
      %s511 = scalar_select %p510, %s507, 7
      %s512 = smul.addr %s509, 8
      %s513 = sadd.s32 %s511, %s512
      %s514 = smul.addr %s513, 8
      %s515 = scalar_lea.vmem %s3, %s514
      // Predicated region
      $region41: #{block_forward.1} parent=31 // pred_check
        %p516 = pneg %p125
      $region42: #{block_forward.1} parent=31 // pred_check_branch
        %518 = sbr.rel (%p516) target = $region44
      $region43: #{block_forward.1} parent=31 // pred_region
        %s519 = smul.u32 %s20, %s21
        %s520 = smul.u32 8, %s519
      $region44: #{block_forward.1} parent=31 // pred_fallthru
        _
    $region32: #{block_forward.1} parent=5 // pred_fallthru
      _
    %p521 = scmp.le.s32.totalorder 2, %s9
    // Predicated region
    $region45: #{block_forward.1} parent=5 // pred_check
      %p522 = pneg %p521
    $region46: #{block_forward.1} parent=5 // pred_check_branch
      %524 = sbr.rel (%p522) target = $region48
    $region47: #{block_forward.1} parent=5 // pred_region
      %s525 = ssub.s32 %s9, 2
      // Predicated region
      $region49: #{block_forward.1} parent=47 // pred_check
        %p526 = pneg %p131
      $region50: #{block_forward.1} parent=47 // pred_check_branch
        %528 = sbr.rel (%p526) target = $region52
      $region51: #{block_forward.1} parent=47 // pred_region
        %s529 = smul.u32 %s23, %s24
        %s530 = smul.u32 8, %s529
        %p531 = scmp.lt.s32.totalorder %s22, 1
        %s532 = scalar_select %p531, %s22, 1
        %p533 = scmp.lt.s32.totalorder %s530, 7
        %s534 = scalar_select %p533, %s530, 7
        %s535 = smul.addr %s532, 8
        %s536 = sadd.s32 %s534, %s535
        %s537 = smul.addr %s536, 8
        %s538 = scalar_lea.vmem %s3, %s537
      $region52: #{block_forward.1} parent=47 // pred_fallthru
        _
    $region48: #{block_forward.1} parent=5 // pred_fallthru
      _
  $region6: #{block_forward.1} parent=0 // loop_footer
    %s13 = sadd.s32 1, %s9
  $region7: #{block_forward.1} parent=0 // loop_footer_branch
    %8 = sbr.rel target = $region3
  $region8: #{block_forward.1} parent=0 // loop_exit
    _

</llo_original>
